<compile_context>
chip_gen: v5e
topology: v5e:2x2
jax: 0.10.0
libtpu: 0.0.40
codegen_flags: <defaults>
</compile_context>

<pallas_src>
import math

import jax
import jax.numpy as jnp
from jax.experimental import pallas as pl
from jax.experimental.pallas import tpu as pltpu

_GELU_C = math.sqrt(2.0 / math.pi)


def _round_up(x, m):
    return ((x + m - 1) // m) * m


def _gelu(h):
    # GELU with tanh approximation, coefficient 0.44715 exactly as the reference
    # module (note: the reference uses 0.44715, not the canonical 0.044715).
    return 0.5 * h * (1.0 + jnp.tanh(_GELU_C * h * (1.0 + 0.44715 * (h * h))))


# ----------------------------- kernels -----------------------------

def _ffn_kernel_resident(x_ref, w1_ref, b1_ref, w2_ref, b2_ref, o_ref):
    """Whole W1/W2 resident in VMEM (constant block index -> fetched once)."""
    h = jnp.dot(x_ref[...], w1_ref[...], preferred_element_type=jnp.float32)
    h = _gelu(h + b1_ref[...].astype(jnp.float32))
    # dropout: identity (eval/inference).  TODO(synk): training-mode dropout.
    out = jnp.dot(h.astype(w2_ref.dtype), w2_ref[...],
                  preferred_element_type=jnp.float32)
    o_ref[...] = (out + b2_ref[...].astype(jnp.float32)).astype(o_ref.dtype)


def _ffn_kernel_streamed(x_ref, w1_ref, b1_ref, w2_ref, b2_ref, o_ref, acc_ref):
    """d_ff streamed along the (arbitrary) k grid axis with an f32 accumulator."""
    k = pl.program_id(1)

    @pl.when(k == 0)
    def _init():
        # fold the second bias into the accumulator init
        acc_ref[...] = jnp.broadcast_to(
            b2_ref[...].astype(jnp.float32), acc_ref.shape)

    h = jnp.dot(x_ref[...], w1_ref[...], preferred_element_type=jnp.float32)
    h = _gelu(h + b1_ref[...].astype(jnp.float32))
    # dropout: identity (eval/inference).  TODO(synk): training-mode dropout.
    acc_ref[...] += jnp.dot(h.astype(w2_ref.dtype), w2_ref[...],
                            preferred_element_type=jnp.float32)

    @pl.when(k == pl.num_programs(1) - 1)
    def _writeback():
        o_ref[...] = acc_ref[...].astype(o_ref.dtype)


# --------------------------- tile planning ---------------------------

def _vmem_capacity_bytes(default=64 << 20):
    try:
        info = pltpu.get_tpu_info()
    except Exception:
        return default
    for attr in ("vmem_capacity_bytes", "vmem_bytes", "vmem_size_bytes"):
        val = getattr(info, attr, None)
        if val:
            return int(val)
    return default


def _vmem_estimate(tm, tf, d_model, x_it, w_it, resident):
    """Rough padded VMEM footprint (double-buffered pipelined tiles)."""
    dm_l = _round_up(d_model, 128)
    tf_l = _round_up(tf, 128)
    est = 2 * tm * dm_l * x_it                        # x tiles
    est += 2 * tm * dm_l * x_it                       # out tiles
    est += 2 * _round_up(d_model, 8) * tf_l * w_it    # W1 tiles
    est += 2 * 8 * tf_l * w_it                        # b1 tiles
    est += 2 * _round_up(tf, 8) * dm_l * w_it         # W2 tiles
    est += 2 * 8 * dm_l * w_it                        # b2 tiles
    est += tm * tf_l * 4                              # f32 GELU intermediate
    if not resident:
        est += tm * dm_l * 4                          # f32 accumulator scratch
    return est


def _plan_tiles(M, d_model, d_ff, x_it, w_it, vmem_cap):
    """Per-generation (tm, tf, resident) selection."""
    budget = (vmem_cap * 3) // 4          # ~96 MiB on 128 MiB parts, ~48 MiB on v7x
    # 64 MiB/core parts (v7x, megacore): cap tm at 512; 128 MiB parts can go to 1024
    # to cross the compute-bound threshold when weights must be re-streamed.
    tm_cap = 1024 if vmem_cap >= (96 << 20) else 512

    def tm_candidates():
        cands, seen = [], set()
        for c in (1024, 768, 512, 384, 256, 128, 64, 32, 16, 8):
            if c > tm_cap:
                continue
            t = M if M < c else c          # tm == full row dim is always legal
            if t not in seen:
                seen.add(t)
                cands.append(t)
        return cands

    # Resident-weights fast path: tf == d_ff, weight block index constant over the
    # whole grid => weights DMA'd from HBM exactly once.
    for tm in tm_candidates():
        if _vmem_estimate(tm, d_ff, d_model, x_it, w_it, resident=True) <= budget:
            return tm, d_ff, True

    # Streamed path: tf in multiples of 256, double-buffered W1+W2 tiles bounded to
    # ~1/3 of the budget so tm (arithmetic-intensity lever) can be maximized.
    gran = 256
    tf = ((budget // 3) // max(1, 4 * d_model * w_it)) // gran * gran
    tf = max(gran, min(tf, 2048, _round_up(d_ff, gran)))
    for tf_try in dict.fromkeys((tf, gran)):
        for tm in tm_candidates():
            if _vmem_estimate(tm, tf_try, d_model, x_it, w_it,
                              resident=False) <= budget:
                return tm, tf_try, False
    # Last resort (enormous d_model): minimal tiles, correctness first.
    return (M if M < 8 else 8), gran, False


# ----------------------------- wrapper -----------------------------

def feed_forward(x, w1, b1, w2, b2, *, tm=None, tf=None):
    """x: [..., d_model] -> [..., d_model].  W follows JAX convention W:[in, out]."""
    orig_shape = x.shape
    d_model = orig_shape[-1]
    d_ff = w1.shape[1]
    x2 = x.reshape(-1, d_model)
    M = x2.shape[0]

    x_it = jnp.dtype(x.dtype).itemsize
    w_it = jnp.dtype(w1.dtype).itemsize
    vmem_cap = _vmem_capacity_bytes()

    tm_p, tf_p, resident = _plan_tiles(M, d_model, d_ff, x_it, w_it, vmem_cap)
    if tm is None:
        tm = tm_p
    else:
        tm = min(M, max(8, int(tm)))
        if tm < M:
            tm = _round_up(tm, 8)
    if tf is None:
        tf = tf_p
    else:
        tf = max(128, _round_up(min(int(tf), d_ff), 128))
        resident = tf >= d_ff
        if resident:
            tf = d_ff

    b1r = b1.reshape(1, d_ff)
    b2r = b2.reshape(1, d_model)

    if resident:
        num_k = 1
    else:
        # Ragged d_ff: zero-pad the hidden dim once to a tf multiple.  GELU(0)=0,
        # so padded hidden columns contribute exactly zero to the second matmul.
        d_ff_p = _round_up(d_ff, tf)
        if d_ff_p != d_ff:
            pad = d_ff_p - d_ff
            w1 = jnp.pad(w1, ((0, 0), (0, pad)))
            b1r = jnp.pad(b1r, ((0, 0), (0, pad)))
            w2 = jnp.pad(w2, ((0, pad), (0, 0)))
        num_k = d_ff_p // tf

    est = _vmem_estimate(tm, d_ff if resident else tf, d_model, x_it, w_it, resident)
    vmem_limit = int(min(max(2 * est, 32 << 20), (vmem_cap * 7) // 8))

    n_row_tiles = pl.cdiv(M, tm)
    w_bytes = (w1.size + w2.size + b1r.size + b2r.size) * w_it
    weight_traffic = w_bytes if resident else n_row_tiles * w_bytes
    cost = pl.CostEstimate(
        flops=4 * M * d_model * d_ff,
        transcendentals=M * d_ff,
        bytes_accessed=int(2 * M * d_model * x_it + weight_traffic),
    )

    if resident:
        out = pl.pallas_call(
            _ffn_kernel_resident,
            out_shape=jax.ShapeDtypeStruct((M, d_model), x.dtype),
            grid_spec=pltpu.PrefetchScalarGridSpec(
                num_scalar_prefetch=0,
                grid=(n_row_tiles,),
                in_specs=[
                    pl.BlockSpec((tm, d_model), lambda i: (i, 0)),   # x row tile
                    pl.BlockSpec((d_model, d_ff), lambda i: (0, 0)),  # W1 (resident)
                    pl.BlockSpec((1, d_ff), lambda i: (0, 0)),        # b1
                    pl.BlockSpec((d_ff, d_model), lambda i: (0, 0)),  # W2 (resident)
                    pl.BlockSpec((1, d_model), lambda i: (0, 0)),     # b2
                ],
                out_specs=pl.BlockSpec((tm, d_model), lambda i: (i, 0)),
            ),
            compiler_params=pltpu.CompilerParams(
                dimension_semantics=("parallel",),
                vmem_limit_bytes=vmem_limit),
            cost_estimate=cost,
        )(x2, w1, b1r, w2, b2r)
    else:
        out = pl.pallas_call(
            _ffn_kernel_streamed,
            out_shape=jax.ShapeDtypeStruct((M, d_model), x.dtype),
            grid_spec=pltpu.PrefetchScalarGridSpec(
                num_scalar_prefetch=0,
                grid=(n_row_tiles, num_k),
                in_specs=[
                    pl.BlockSpec((tm, d_model), lambda i, k: (i, 0)),  # x row tile
                    pl.BlockSpec((d_model, tf), lambda i, k: (0, k)),  # W1 hidden tile
                    pl.BlockSpec((1, tf), lambda i, k: (0, k)),        # b1 tile
                    pl.BlockSpec((tf, d_model), lambda i, k: (k, 0)),  # W2 hidden tile
                    pl.BlockSpec((1, d_model), lambda i, k: (0, 0)),   # b2
                ],
                out_specs=pl.BlockSpec((tm, d_model), lambda i, k: (i, 0)),
                scratch_shapes=[pltpu.VMEM((tm, d_model), jnp.float32)],
            ),
            compiler_params=pltpu.CompilerParams(
                dimension_semantics=("parallel", "arbitrary"),
                vmem_limit_bytes=vmem_limit),
            cost_estimate=cost,
        )(x2, w1, b1r, w2, b2r)

    return out.reshape(orig_shape)


def _reference(x, w1, b1, w2, b2):
    c = math.sqrt(2.0 / math.pi)
    h = x @ w1 + b1
    h = 0.5 * h * (1.0 + jnp.tanh(c * (h + 0.44715 * h ** 3)))
    return h @ w2 + b2


if __name__ == "__main__":
    key = jax.random.PRNGKey(0)
    B, S, d_model, d_ff = 2, 8, 32, 64

    k_x, k_w1, k_b1, k_w2, k_b2 = jax.random.split(key, 5)
    x = jax.random.normal(k_x, (B, S, d_model), dtype=jnp.float32)

    # Deterministic init mimicking nn.Linear (uniform(-1/sqrt(fan_in), 1/sqrt(fan_in)))
    lim1 = 1.0 / math.sqrt(d_model)
    lim2 = 1.0 / math.sqrt(d_ff)
    w1 = jax.random.uniform(k_w1, (d_model, d_ff), jnp.float32, -lim1, lim1)
    b1 = jax.random.uniform(k_b1, (d_ff,), jnp.float32, -lim1, lim1)
    w2 = jax.random.uniform(k_w2, (d_ff, d_model), jnp.float32, -lim2, lim2)
    b2 = jax.random.uniform(k_b2, (d_model,), jnp.float32, -lim2, lim2)

    y = feed_forward(x, w1, b1, w2, b2)
    jax.block_until_ready(y)

    y_ref = _reference(x, w1, b1, w2, b2)
    assert y.shape == (B, S, d_model)
    assert jnp.allclose(y, y_ref, atol=1e-5, rtol=1e-5), "mismatch vs reference"

    print("KERNEL_OK")
</pallas_src>

<mosaic_0001>
module attributes {stable_mosaic.version = 11 : i64} {
  func.func @_ffn_kernel_resident(%arg0: i32, %arg1: memref<16x32xf32, #tpu.memory_space<vmem>>, %arg2: memref<32x64xf32, #tpu.memory_space<vmem>>, %arg3: memref<1x64xf32, #tpu.memory_space<vmem>>, %arg4: memref<64x32xf32, #tpu.memory_space<vmem>>, %arg5: memref<1x32xf32, #tpu.memory_space<vmem>>, %arg6: memref<16x32xf32, #tpu.memory_space<vmem>>) attributes {dimension_semantics = [#tpu.dimension_semantics<parallel>], iteration_bounds = array<i64: 1>, scalar_prefetch = 0 : i64, scratch_operands = 0 : i64, tpu.core_type = #tpu.core_type<tc>, window_params = [{transform_indices = @transform_0, window_bounds = array<i64: 16, 32>}, {pipeline_mode = #tpu.pipeline_mode<synchronous>, transform_indices = @transform_1, window_bounds = array<i64: 32, 64>}, {pipeline_mode = #tpu.pipeline_mode<synchronous>, transform_indices = @transform_2, window_bounds = array<i64: 1, 64>}, {pipeline_mode = #tpu.pipeline_mode<synchronous>, transform_indices = @transform_3, window_bounds = array<i64: 64, 32>}, {pipeline_mode = #tpu.pipeline_mode<synchronous>, transform_indices = @transform_4, window_bounds = array<i64: 1, 32>}, {transform_indices = @transform_5, window_bounds = array<i64: 16, 32>}]} {
    %c0 = arith.constant 0 : index
    %c0_0 = arith.constant 0 : index
    %0 = vector.load %arg1[%c0, %c0_0] : memref<16x32xf32, #tpu.memory_space<vmem>>, vector<16x32xf32>
    %c0_1 = arith.constant 0 : index
    %c0_2 = arith.constant 0 : index
    %1 = vector.load %arg2[%c0_1, %c0_2] : memref<32x64xf32, #tpu.memory_space<vmem>>, vector<32x64xf32>
    %cst = arith.constant dense<0.000000e+00> : vector<16x64xf32>
    %2 = tpu.matmul %0, %1, %cst {dimension_numbers = #tpu.dot_dimension_numbers<[1], [0], [0], [1], [0, 0, 1, 1], [], []>} : vector<16x32xf32>, vector<32x64xf32>, vector<16x64xf32> -> vector<16x64xf32>
    %c0_3 = arith.constant 0 : index
    %c0_4 = arith.constant 0 : index
    %3 = vector.load %arg3[%c0_3, %c0_4] : memref<1x64xf32, #tpu.memory_space<vmem>>, vector<1x64xf32>
    %4 = vector.broadcast %3 : vector<1x64xf32> to vector<16x64xf32>
    %5 = arith.addf %2, %4 : vector<16x64xf32>
    %cst_5 = arith.constant 5.000000e-01 : f32
    %6 = vector.broadcast %cst_5 : f32 to vector<16x64xf32>
    %7 = arith.mulf %6, %5 : vector<16x64xf32>
    %cst_6 = arith.constant 0.797884583 : f32
    %8 = vector.broadcast %cst_6 : f32 to vector<16x64xf32>
    %9 = arith.mulf %8, %5 : vector<16x64xf32>
    %10 = arith.mulf %5, %5 : vector<16x64xf32>
    %cst_7 = arith.constant 4.471500e-01 : f32
    %11 = vector.broadcast %cst_7 : f32 to vector<16x64xf32>
    %12 = arith.mulf %11, %10 : vector<16x64xf32>
    %cst_8 = arith.constant 1.000000e+00 : f32
    %13 = vector.broadcast %cst_8 : f32 to vector<16x64xf32>
    %14 = arith.addf %13, %12 : vector<16x64xf32>
    %15 = arith.mulf %9, %14 : vector<16x64xf32>
    %16 = math.tanh %15 : vector<16x64xf32>
    %cst_9 = arith.constant 1.000000e+00 : f32
    %17 = vector.broadcast %cst_9 : f32 to vector<16x64xf32>
    %18 = arith.addf %17, %16 : vector<16x64xf32>
    %19 = arith.mulf %7, %18 : vector<16x64xf32>
    %c0_10 = arith.constant 0 : index
    %c0_11 = arith.constant 0 : index
    %20 = vector.load %arg4[%c0_10, %c0_11] : memref<64x32xf32, #tpu.memory_space<vmem>>, vector<64x32xf32>
    %cst_12 = arith.constant dense<0.000000e+00> : vector<16x32xf32>
    %21 = tpu.matmul %19, %20, %cst_12 {dimension_numbers = #tpu.dot_dimension_numbers<[1], [0], [0], [1], [0, 0, 1, 1], [], []>} : vector<16x64xf32>, vector<64x32xf32>, vector<16x32xf32> -> vector<16x32xf32>
    %c0_13 = arith.constant 0 : index
    %c0_14 = arith.constant 0 : index
    %22 = vector.load %arg5[%c0_13, %c0_14] : memref<1x32xf32, #tpu.memory_space<vmem>>, vector<1x32xf32>
    %23 = vector.broadcast %22 : vector<1x32xf32> to vector<16x32xf32>
    %24 = arith.addf %21, %23 : vector<16x32xf32>
    %c0_15 = arith.constant 0 : index
    %c0_16 = arith.constant 0 : index
    %25 = vector.load %arg6[%c0_15, %c0_16] : memref<16x32xf32, #tpu.memory_space<vmem>>, vector<16x32xf32>
    tpu.vector_store %arg6[%c0_15, %c0_16], %24 {strides = array<i32>} : memref<16x32xf32, #tpu.memory_space<vmem>>, vector<16x32xf32>,
    return
  }
  func.func @transform_0(%arg0: i32) -> (i32, i32) {
    %c0_i32 = arith.constant 0 : i32
    %c0_i32_0 = arith.constant 0 : i32
    return %arg0, %c0_i32 : i32, i32
  }
  func.func @transform_1(%arg0: i32) -> (i32, i32) {
    %c0_i32 = arith.constant 0 : i32
    %c0_i32_0 = arith.constant 0 : i32
    %c0_i32_1 = arith.constant 0 : i32
    return %c0_i32, %c0_i32_0 : i32, i32
  }
  func.func @transform_2(%arg0: i32) -> (i32, i32) {
    %c0_i32 = arith.constant 0 : i32
    %c0_i32_0 = arith.constant 0 : i32
    %c0_i32_1 = arith.constant 0 : i32
    return %c0_i32, %c0_i32_0 : i32, i32
  }
  func.func @transform_3(%arg0: i32) -> (i32, i32) {
    %c0_i32 = arith.constant 0 : i32
    %c0_i32_0 = arith.constant 0 : i32
    %c0_i32_1 = arith.constant 0 : i32
    return %c0_i32, %c0_i32_0 : i32, i32
  }
  func.func @transform_4(%arg0: i32) -> (i32, i32) {
    %c0_i32 = arith.constant 0 : i32
    %c0_i32_0 = arith.constant 0 : i32
    %c0_i32_1 = arith.constant 0 : i32
    return %c0_i32, %c0_i32_0 : i32, i32
  }
  func.func @transform_5(%arg0: i32) -> (i32, i32) {
    %c0_i32 = arith.constant 0 : i32
    %c0_i32_0 = arith.constant 0 : i32
    return %arg0, %c0_i32 : i32, i32
  }
}

</mosaic_0001>

<llo_original>
// kernel: tpu_custom_call.1
$region0: #{tpu_custom_call.1}
  #allocation0 [shape = 'u32[]', space=smem, size = 0x4, offset = 0x4, fixed_abs, tag = 'smem constant byte address 0x4 - core index']
  #allocation1 [shape = 'u32[72,128]{1,0:T(1,128)}', space=vmem, size = 0x9000, scoped, tag = 'internal scratch']
  %s0 = inlined_call_operand.vmem [shape: f32[16,32], index: 0, kind: input, shape index: {}]
  %s1 = inlined_call_operand.vmem [shape: f32[32,64], index: 1, kind: input, shape index: {}]
  %s2 = inlined_call_operand.vmem [shape: f32[1,64], index: 2, kind: input, shape index: {}]
  %s3 = inlined_call_operand.vmem [shape: f32[64,32], index: 3, kind: input, shape index: {}]
  %s4 = inlined_call_operand.vmem [shape: f32[1,32], index: 4, kind: input, shape index: {}]
  %s5 = inlined_call_operand.hbm [shape: f32[16,32], index: 5, kind: output, shape index: {}]
  %s6 = sld [smem:[#allocation0]]
  $region30: #{tpu_custom_call.1} parent=0
    _
  %s8 = ssub.s32 1, %s6
  %s9 = scalar_select 0, %s8, %s6
  $region1: #{tpu_custom_call.1} parent=0
    #allocation2 [shape = 'u8[8192]{0}', space=vmem, size = 0x2000, scoped, tag = 'output window, operand 0, single buffered']
    #allocation3 [shape = 's32[1]{0}', space=sflag, size = 0x4, scoped, tag = 'scoped memory for tpu_custom_call.1']
    %10 = vsyncpa [#allocation3], 0
    // Predicated region
    $region2: #{tpu_custom_call.1} parent=1 // pred_check
      _
    $region3: #{tpu_custom_call.1} parent=1 // pred_check_branch
      %12 = sbr.rel (0) target = $region5
    $region4: #{tpu_custom_call.1} parent=1 // pred_region
      _
    $region5: #{tpu_custom_call.1} parent=1 // pred_fallthru
      _
    // Predicated region
    $region6: #{tpu_custom_call.1} parent=1 // pred_check
      _
    $region7: #{tpu_custom_call.1} parent=1 // pred_check_branch
      %14 = sbr.rel (0) target = $region9
    $region8: #{tpu_custom_call.1} parent=1 // pred_region
      _
    $region9: #{tpu_custom_call.1} parent=1 // pred_fallthru
      _
    // Predicated region
    $region10: #{tpu_custom_call.1} parent=1 // pred_check
      _
    $region11: #{tpu_custom_call.1} parent=1 // pred_check_branch
      %16 = sbr.rel (0) target = $region13
    $region12: #{tpu_custom_call.1} parent=1 // pred_region
      _
    $region13: #{tpu_custom_call.1} parent=1 // pred_fallthru
      _
    // Predicated region
    $region14: #{tpu_custom_call.1} parent=1 // pred_check
      _
    $region15: #{tpu_custom_call.1} parent=1 // pred_check_branch
      %18 = sbr.rel (0) target = $region17
    $region16: #{tpu_custom_call.1} parent=1 // pred_region
      _
    $region17: #{tpu_custom_call.1} parent=1 // pred_fallthru
      _
    // Predicated region
    $region18: #{tpu_custom_call.1} parent=1 // pred_check
      _
    $region19: #{tpu_custom_call.1} parent=1 // pred_check_branch
      %20 = sbr.rel (0) target = $region21
    $region20: #{tpu_custom_call.1} parent=1 // pred_region
      _
    $region21: #{tpu_custom_call.1} parent=1 // pred_fallthru
      _
    %v21 = vld [vmem:[%s0] sm:$0xff]
    %v22 = vld [vmem:[%s0 + $0x8] sm:$0xff]
    %v23 = vld [vmem:[%s1] sm:$0xff]
    %v24 = vld [vmem:[%s1 + $0x8] sm:$0xff]
    %v25 = vld [vmem:[%s1 + $0x10] sm:$0xff]
    %v26 = vld [vmem:[%s1 + $0x18] sm:$0xff]
    %v27 = vld [vmem:[%s2] sm:$0x1]
    %v29 = vperm.slane %v27, 0
    %vm31 = vcmask 261120
    %v33 = vsel %vm31, %v21, 0
    %v36 = vsel %vm31, %v22, 0
    %38 = vmatpush.msra.mxu0 0.0
    %39 = vmatpush.msra.mxu0 0.0
    %40 = vmatpush.msra.mxu0 0.0
    %41 = vmatpush.msra.mxu0 0.0
    %42 = vmatpush.msra.mxu0 0.0
    %43 = vmatpush.msra.mxu0 0.0
    %44 = vmatpush.msra.mxu0 0.0
    %45 = vmatpush.msra.mxu0 0.0
    %46 = vmatpush.msra.mxu0 0.0
    %47 = vmatpush.msra.mxu0 0.0
    %48 = vmatpush.msra.mxu0 0.0
    %49 = vmatpush.msra.mxu0 0.0
    %50 = vmatpush.msra.mxu0 %v26
    %51 = vmatpush.msra.mxu0 %v25
    %52 = vmatpush.msra.mxu0 %v24
    %53 = vmatpush.msra.mxu0 %v23
    %54 = vmatmul.f32.gmra.mxu0 %v33
    %v55 = vpop.f32.mrf.mxu0
    %v56 = vadd.f32 %v29, %v55
    %57 = vmatmul.f32.gmra.mxu0 %v36
    %v58 = vpop.f32.mrf.mxu0
    %v59 = vadd.f32 %v29, %v58
    %60 = vdwg.mxu0
    %v61 = vmul.f32 %v56, 0.5
    %v62 = vmul.f32 %v59, 0.5
    %v63 = vmul.f32 %v56, 0.7978846
    %v64 = vmul.f32 %v59, 0.7978846
    %v65 = vmul.f32 %v56, %v56
    %v66 = vmul.f32 %v59, %v59
    %v67 = vmul.f32 %v65, 0.44715
    %v68 = vmul.f32 %v66, 0.44715
    %v69 = vadd.f32 %v67, 1.0
    %v70 = vadd.f32 %v68, 1.0
    %v71 = vmul.f32 %v63, %v69
    %v72 = vmul.f32 %v64, %v70
    %v73 = vtanh.pop %v71
    %v74 = vtanh.pop %v72
    %v75 = vadd.f32 %v73, 1.0
    %v76 = vadd.f32 %v74, 1.0
    %v77 = vmul.f32 %v61, %v75
    %v78 = vmul.f32 %v62, %v76
    %v79 = vld [vmem:[%s3] sm:$0xff]
    %v80 = vld [vmem:[%s3 + $0x8] sm:$0xff]
    %v81 = vld [vmem:[%s3 + $0x10] sm:$0xff]
    %v82 = vld [vmem:[%s3 + $0x18] sm:$0xff]
    %v83 = vld [vmem:[%s3 + $0x20] sm:$0xff]
    %v84 = vld [vmem:[%s3 + $0x28] sm:$0xff]
    %v85 = vld [vmem:[%s3 + $0x30] sm:$0xff]
    %v86 = vld [vmem:[%s3 + $0x38] sm:$0xff]
    %v87 = vld [vmem:[%s4] sm:$0x1]
    %v89 = vperm.slane %v87, 0
    %vm91 = vcmask 523264
    %v93 = vsel %vm91, %v77, 0
    %v96 = vsel %vm91, %v78, 0
    %98 = vmatpush.msra.mxu0 0.0
    %99 = vmatpush.msra.mxu0 0.0
    %100 = vmatpush.msra.mxu0 0.0
    %101 = vmatpush.msra.mxu0 0.0
    %102 = vmatpush.msra.mxu0 0.0
    %103 = vmatpush.msra.mxu0 0.0
    %104 = vmatpush.msra.mxu0 0.0
    %105 = vmatpush.msra.mxu0 0.0
    %106 = vmatpush.msra.mxu0 %v86
    %107 = vmatpush.msra.mxu0 %v85
    %108 = vmatpush.msra.mxu0 %v84
    %109 = vmatpush.msra.mxu0 %v83
    %110 = vmatpush.msra.mxu0 %v82
    %111 = vmatpush.msra.mxu0 %v81
    %112 = vmatpush.msra.mxu0 %v80
    %113 = vmatpush.msra.mxu0 %v79
    %114 = vmatmul.f32.gmra.mxu0 %v93
    %v115 = vpop.f32.mrf.mxu0
    %v116 = vadd.f32 %v89, %v115
    %117 = vmatmul.f32.gmra.mxu0 %v96
    %v118 = vpop.f32.mrf.mxu0
    %v119 = vadd.f32 %v89, %v118
    %120 = vdwg.mxu0
    %121 = vst.msk [vmem:[#allocation2] sm:$0xff] %vm31, %v116
    %122 = vst.msk [vmem:[#allocation2 + $0x8] sm:$0xff] %vm31, %v119
    // Predicated region
    $region22: #{tpu_custom_call.1} parent=1 // pred_check
      _
    $region23: #{tpu_custom_call.1} parent=1 // pred_check_branch
      %124 = sbr.rel (0) target = $region25
    $region24: #{tpu_custom_call.1} parent=1 // pred_region
      %126 = vsyncadd [#allocation3], 0
      %s127 = sshll.u32 [#allocation2], 4
      %s128 = int_to_ptr.vmem [resolvable:$true] %s127
      %s129 = sshll.u32 %s5, 4
      %s130 = int_to_ptr.hbm [resolvable:$true] %s129
      %135 = dma.vmem_to_hbm [thread:$0]  %s128, 256, %s130, [#allocation3], 128, 128, 8
    $region25: #{tpu_custom_call.1} parent=1 // pred_fallthru
      _
    // Predicated region
    $region26: #{tpu_custom_call.1} parent=1 // pred_check
      _
    $region27: #{tpu_custom_call.1} parent=1 // pred_check_branch
      %137 = sbr.rel (0) target = $region29
    $region28: #{tpu_custom_call.1} parent=1 // pred_region
      %139 = dma.done [#allocation3], 256
    $region29: #{tpu_custom_call.1} parent=1 // pred_fallthru
      _
    %140 = vsyncpa [#allocation3], 1

</llo_original>
